<compile_context>
chip_gen: v7x
topology: tpu7x:2x2x1
jax: 0.10.0
libtpu: 0.0.40
codegen_flags: <defaults>
</compile_context>

<pallas_src>
import jax
import jax.numpy as jnp
from jax.experimental import pallas as pl
from jax.experimental.pallas import tpu as pltpu


def _bounds(dtype):
    """Unbounded-side sentinels for the given dtype."""
    dtype = jnp.dtype(dtype)
    if jnp.issubdtype(dtype, jnp.floating):
        return -float("inf"), float("inf")
    info = jnp.iinfo(dtype)
    return int(info.min), int(info.max)


def _clip_ref(boxes4, width, height):
    """Fused jnp clamp on an (..., 4) array. Small-input / ragged-tail path."""
    dtype = boxes4.dtype
    neg, pos = _bounds(dtype)
    lo = jnp.array([0, 0, neg, neg], dtype=dtype)
    hi = jnp.array([pos, pos, width, height], dtype=dtype)
    return jnp.minimum(jnp.maximum(boxes4, lo), hi)


def _make_clip_kernel(width, height, dtype):
    """Kernel over a lane-dense (rows, 128) slab; lane l carries coord l % 4."""
    neg, pos = _bounds(dtype)

    def kernel(x_ref, o_ref):
        # Per-lane bounds, built from constants at trace time (no extra inputs,
        # no HBM traffic).  128 % 4 == 0, so lane l always holds coordinate l%4.
        coord = jax.lax.broadcasted_iota(jnp.int32, (1, 128), 1) & 3
        lo = jnp.where(coord < 2, jnp.asarray(0, dtype), jnp.asarray(neg, dtype))
        hi = jnp.where(coord == 2, jnp.asarray(width, dtype),
                       jnp.where(coord == 3, jnp.asarray(height, dtype),
                                 jnp.asarray(pos, dtype)))
        o_ref[...] = jnp.minimum(jnp.maximum(x_ref[...], lo), hi)

    return kernel


def _pick_block_rows(rows, max_block_rows):
    """Big blocks to amortize ~0.35us/step overhead; >=4 steps when large
    (2 per TensorCore on v7x); cap so double-buffered in+out stays small."""
    if rows <= 512:
        return rows  # single block; block_shape == full array dims is allowed
    target = max(512, ((rows // 4) // 8) * 8)
    return min(max_block_rows, target)


def clip_boxes(boxes, img, *, block_rows=4096, min_rows_for_kernel=64):
    """Pallas equivalent of ClipBoxes.forward(boxes, img).

    boxes: (B, N, 4) with last dim [x1, y1, x2, y2]
    img:   (B, C, H, W) -- only its static H/W are used.
    """
    batch_size, num_channels, height, width = img.shape
    B, N, C4 = boxes.shape
    assert C4 == 4, "boxes last dim must be 4"
    dtype = boxes.dtype

    total = B * N * 4
    rows = total // 128

    # Tiny inputs: a fused XLA clamp beats pallas_call launch overhead.
    if rows < min_rows_for_kernel:
        return _clip_ref(boxes, width, height)

    kernel = _make_clip_kernel(width, height, dtype)

    flat = boxes.reshape(-1)                      # bitcast view, no copy
    aligned = rows * 128
    if aligned == total:
        head = flat.reshape(rows, 128)            # single-pass path
    else:
        head = flat[:aligned].reshape(rows, 128)  # prefix copy (ragged only)

    br = _pick_block_rows(rows, block_rows)
    grid = (pl.cdiv(rows, br),)

    out_head = pl.pallas_call(
        kernel,
        out_shape=jax.ShapeDtypeStruct((rows, 128), dtype),
        grid=grid,
        in_specs=[pl.BlockSpec((br, 128), lambda i: (i, 0))],
        out_specs=pl.BlockSpec((br, 128), lambda i: (i, 0)),
        compiler_params=pltpu.CompilerParams(
            dimension_semantics=("parallel",)),
    )(head)

    out_flat = out_head.reshape(-1)
    if aligned != total:
        # Ragged tail (< 128 elements, always a multiple of 4).
        # TODO(synk): callers should keep B*N % 32 == 0 to stay on the
        # single-pass path; this concatenate costs one extra HBM pass.
        tail = flat[aligned:].reshape(-1, 4)
        out_tail = _clip_ref(tail, width, height).reshape(-1)
        out_flat = jnp.concatenate([out_flat, out_tail])
    return out_flat.reshape(B, N, 4)


if __name__ == "__main__":
    key = jax.random.PRNGKey(0)
    k1, k2, k3, k4 = jax.random.split(key, 4)

    C, H, W = 4, 16, 16
    img = jax.random.normal(k2, (2, C, H, W), dtype=jnp.float32)

    def torch_like_ref(boxes, width, height):
        ref = boxes
        ref = ref.at[:, :, 0].set(jnp.maximum(boxes[:, :, 0], 0.0))
        ref = ref.at[:, :, 1].set(jnp.maximum(boxes[:, :, 1], 0.0))
        ref = ref.at[:, :, 2].set(jnp.minimum(boxes[:, :, 2], float(width)))
        ref = ref.at[:, :, 3].set(jnp.minimum(boxes[:, :, 3], float(height)))
        return ref

    def check(B, N, k):
        boxes = jax.random.uniform(k, (B, N, 4), dtype=jnp.float32,
                                   minval=-8.0, maxval=24.0)
        out = jax.block_until_ready(clip_boxes(boxes, img))
        ref = torch_like_ref(boxes, W, H)
        assert out.shape == boxes.shape and out.dtype == boxes.dtype
        assert jnp.allclose(out, ref), f"mismatch vs reference (B={B}, N={N})"

    check(2, 16384, k1)   # aligned path: lane-dense kernel, multi-step grid
    check(2, 15997, k3)   # ragged path: prefix kernel + jnp tail
    check(2, 8, k4)       # small-input fallback: fused jnp clamp

    print("KERNEL_OK")
</pallas_src>

<mosaic_0001>
module attributes {stable_mosaic.version = 11 : i64} {
  func.func @kernel(%arg0: i32, %arg1: memref<512x128xf32, #tpu.memory_space<vmem>>, %arg2: memref<512x128xf32, #tpu.memory_space<vmem>>) attributes {dimension_semantics = [#tpu.dimension_semantics<parallel>], iteration_bounds = array<i64: 2>, scalar_prefetch = 0 : i64, scratch_operands = 0 : i64, tpu.core_type = #tpu.core_type<tc>, window_params = [{transform_indices = @transform_0, window_bounds = array<i64: 512, 128>}, {transform_indices = @transform_1, window_bounds = array<i64: 512, 128>}]} {
    %0 = tpu.iota {dimensions = array<i32: 1>} : vector<1x128xi32>
    %c3_i32 = arith.constant 3 : i32
    %1 = vector.broadcast %c3_i32 : i32 to vector<1x128xi32>
    %2 = arith.andi %0, %1 : vector<1x128xi32>
    %c2_i32 = arith.constant 2 : i32
    %3 = vector.broadcast %c2_i32 : i32 to vector<1x128xi32>
    %4 = arith.cmpi slt, %2, %3 : vector<1x128xi32>
    %cst = arith.constant 0.000000e+00 : f32
    %cst_0 = arith.constant 0xFF800000 : f32
    %5 = vector.broadcast %cst : f32 to vector<1x128xf32>
    %6 = vector.broadcast %cst_0 : f32 to vector<1x128xf32>
    %7 = arith.select %4, %5, %6 : vector<1x128xi1>, vector<1x128xf32>
    %c2_i32_1 = arith.constant 2 : i32
    %8 = vector.broadcast %c2_i32_1 : i32 to vector<1x128xi32>
    %9 = arith.cmpi eq, %2, %8 : vector<1x128xi32>
    %c3_i32_2 = arith.constant 3 : i32
    %10 = vector.broadcast %c3_i32_2 : i32 to vector<1x128xi32>
    %11 = arith.cmpi eq, %2, %10 : vector<1x128xi32>
    %cst_3 = arith.constant 1.600000e+01 : f32
    %cst_4 = arith.constant 0x7F800000 : f32
    %12 = vector.broadcast %cst_3 : f32 to vector<1x128xf32>
    %13 = vector.broadcast %cst_4 : f32 to vector<1x128xf32>
    %14 = arith.select %11, %12, %13 : vector<1x128xi1>, vector<1x128xf32>
    %cst_5 = arith.constant 1.600000e+01 : f32
    %15 = vector.broadcast %cst_5 : f32 to vector<1x128xf32>
    %16 = arith.select %9, %15, %14 : vector<1x128xi1>, vector<1x128xf32>
    %c0 = arith.constant 0 : index
    %c0_6 = arith.constant 0 : index
    %17 = vector.load %arg1[%c0, %c0_6] : memref<512x128xf32, #tpu.memory_space<vmem>>, vector<512x128xf32>
    %18 = vector.broadcast %7 : vector<1x128xf32> to vector<512x128xf32>
    %19 = arith.maximumf %17, %18 : vector<512x128xf32>
    %20 = vector.broadcast %16 : vector<1x128xf32> to vector<512x128xf32>
    %21 = arith.minimumf %19, %20 : vector<512x128xf32>
    %c0_7 = arith.constant 0 : index
    %c0_8 = arith.constant 0 : index
    %22 = vector.load %arg2[%c0_7, %c0_8] : memref<512x128xf32, #tpu.memory_space<vmem>>, vector<512x128xf32>
    tpu.vector_store %arg2[%c0_7, %c0_8], %21 {strides = array<i32>} : memref<512x128xf32, #tpu.memory_space<vmem>>, vector<512x128xf32>,
    return
  }
  func.func @transform_0(%arg0: i32) -> (i32, i32) {
    %c0_i32 = arith.constant 0 : i32
    %c0_i32_0 = arith.constant 0 : i32
    return %arg0, %c0_i32 : i32, i32
  }
  func.func @transform_1(%arg0: i32) -> (i32, i32) {
    %c0_i32 = arith.constant 0 : i32
    %c0_i32_0 = arith.constant 0 : i32
    return %arg0, %c0_i32 : i32, i32
  }
}

</mosaic_0001>

<llo_original>
// kernel: tpu_custom_call.1
$region0: #{tpu_custom_call.1}
  #allocation0 [shape = 'u32[]', space=smem, size = 0x4, offset = 0x4, fixed_abs, tag = 'smem constant byte address 0x4 - core index']
  #allocation1 [shape = 'u32[144,128]{1,0:T(1,128)}', space=vmem, size = 0x12000, scoped, tag = 'internal scratch']
  %s0 = inlined_call_operand.hbm [shape: f32[1024,128], index: 0, kind: input, shape index: {}]
  %s1 = inlined_call_operand.hbm [shape: f32[1024,128], index: 1, kind: output, shape index: {}]
  %s2 = sld [smem:[#allocation0]]
  $region41: #{tpu_custom_call.1} parent=0
    _
  %s4 = ssub.s32 1, %s2
  %s5 = scalar_select 0, %s4, %s2
  $region1: #{tpu_custom_call.1} parent=0
    #allocation2 [shape = 'u8[524288]{0}', space=vmem, size = 0x80000, scoped, tag = 'input window, operand 0']
    #allocation3 [shape = 's32[2]{0}', space=sflag, size = 0x8, scoped, tag = 'scoped memory for tpu_custom_call.1']
    #allocation4 [shape = 's32[2]{0}', space=sflag, size = 0x8, scoped, tag = 'scoped memory for tpu_custom_call.1']
    #allocation5 [shape = 'u8[524288]{0}', space=vmem, size = 0x80000, scoped, tag = 'output window, operand 0']
    %6 = vsyncpa [#allocation3], 0
    %s7 = scalar_lea.sflag [#allocation3], 1
    %8 = vsyncpa %s7, 0
    %9 = vsyncpa [#allocation4], 0
    %s10 = scalar_lea.sflag [#allocation4], 1
    %11 = vsyncpa %s10, 0
    loop: start=0, step=1, limit=4
    $region2: #{tpu_custom_call.1} parent=1 // loop_pre_header
      _
    $region3: #{tpu_custom_call.1} parent=1 // loop_header
      %s13 = sphi 0, %s17
      %p14 = scmp.ge.s32.totalorder %s13, 4
      %s23 = sphi 0, %s25
      %s26 = sphi 0, %s23
      %s27 = sphi 0, %s26
      %s43 = sphi 0, %s27
      %s49 = sphi 0, %s51
      %s52 = sphi 0, %s49
      %s53 = sphi 0, %s52
      %s69 = sphi 0, %s53
    $region4: #{tpu_custom_call.1} parent=1 // loop_header_branch
      %16 = sbr.rel (%p14) target = $region8
    $region5: #{tpu_custom_call.1} parent=1 // loop_body
      %s18 = ssub.s32 %s13, 1
      %s19 = ssub.s32 %s13, 2
      %s20 = sadd.s32 %s13, 1
      %s21 = ssub.s32 %s13, %s20
      %p22 = scmp.eq.s32.totalorder %s21, 0
      %s24 = sadd.s32 %s23, 1
      %s25 = scalar_select %p22, %s23, %s24
      %p28 = pneg %p22
      %p29 = scmp.eq.s32.totalorder %s13, 1
      %p30 = por %p28, %p29
      %p31 = scmp.ne.s32.totalorder %s23, %s26
      %p32 = scmp.eq.s32.totalorder %s13, 0
      %p33 = por %p31, %p32
      %p34 = scmp.ne.s32.totalorder %s23, %s26
      %p35 = scmp.eq.s32.totalorder %s18, 1
      %p36 = por %p34, %p35
      %p37 = scmp.ne.s32.totalorder %s26, %s27
      %p38 = scmp.eq.s32.totalorder %s18, 0
      %p39 = por %p37, %p38
      %p40 = scmp.ne.s32.totalorder %s26, %s27
      %p41 = scmp.eq.s32.totalorder %s19, 1
      %p42 = por %p40, %p41
      %p44 = scmp.ne.s32.totalorder %s27, %s43
      %p45 = scmp.eq.s32.totalorder %s19, 0
      %p46 = por %p44, %p45
      %s47 = ssub.s32 %s13, %s20
      %p48 = scmp.eq.s32.totalorder %s47, 0
      %s50 = sadd.s32 %s49, 1
      %s51 = scalar_select %p48, %s49, %s50
      %p54 = pneg %p48
      %p55 = scmp.eq.s32.totalorder %s13, 1
      %p56 = por %p54, %p55
      %p57 = scmp.ne.s32.totalorder %s49, %s52
      %p58 = scmp.eq.s32.totalorder %s13, 0
      %p59 = por %p57, %p58
      %p60 = scmp.ne.s32.totalorder %s49, %s52
      %p61 = scmp.eq.s32.totalorder %s18, 1
      %p62 = por %p60, %p61
      %p63 = scmp.ne.s32.totalorder %s52, %s53
      %p64 = scmp.eq.s32.totalorder %s18, 0
      %p65 = por %p63, %p64
      %p66 = scmp.ne.s32.totalorder %s52, %s53
      %p67 = scmp.eq.s32.totalorder %s19, 1
      %p68 = por %p66, %p67
      %p70 = scmp.ne.s32.totalorder %s53, %s69
      %p71 = scmp.eq.s32.totalorder %s19, 0
      %p72 = por %p70, %p71
      %p73 = scmp.le.s32.totalorder 1, %s13
      %p74 = scmp.lt.s32.totalorder %s13, 3
      %p75 = pnand %p73, %p74
      %p76 = pneg %p75
      // Predicated region
      $region9: #{tpu_custom_call.1} parent=5 // pred_check
        _
      $region10: #{tpu_custom_call.1} parent=5 // pred_check_branch
        %78 = sbr.rel (%p75) target = $region12
      $region11: #{tpu_custom_call.1} parent=5 // pred_region
        %s79 = ssub.s32 %s13, 1
      $region12: #{tpu_custom_call.1} parent=5 // pred_fallthru
        _
      %p80 = scmp.lt.s32.totalorder %s13, 2
      // Predicated region
      $region13: #{tpu_custom_call.1} parent=5 // pred_check
        %p81 = pneg %p80
      $region14: #{tpu_custom_call.1} parent=5 // pred_check_branch
        %83 = sbr.rel (%p81) target = $region16
      $region15: #{tpu_custom_call.1} parent=5 // pred_region
        // Predicated region
        $region17: #{tpu_custom_call.1} parent=15 // pred_check
          %p84 = pneg %p33
        $region18: #{tpu_custom_call.1} parent=15 // pred_check_branch
          %86 = sbr.rel (%p84) target = $region20
        $region19: #{tpu_custom_call.1} parent=15 // pred_region
          %s87 = sand.u32 %s23, 1
          %s88 = scalar_lea.sflag [#allocation3], %s87
          %s89 = sand.u32 %s23, 1
          %s90 = smul.addr %s89, 512
          %s91 = scalar_lea.vmem [#allocation2], %s90
          %s92 = smul.u32 64, %s13
          %s94 = ssub.s32 8192, 8192
          %95 = vsyncadd %s88, %s94
          %s96 = smul.addr %s92, 128
          %s97 = scalar_lea.hbm %s0, %s96
          %s98 = sshll.u32 %s91, 4
          %s99 = int_to_ptr.vmem [resolvable:$true] %s98
          %104 = dma.hbm_to_vmem [thread:$0]  %s97, 8192, %s99, %s88, 128, 128, 8
        $region20: #{tpu_custom_call.1} parent=15 // pred_fallthru
          _
      $region16: #{tpu_custom_call.1} parent=5 // pred_fallthru
        _
      %p105 = scmp.le.s32.totalorder 1, %s13
      %p106 = scmp.lt.s32.totalorder %s13, 3
      %p107 = pnand %p105, %p106
      %p108 = pneg %p107
      // Predicated region
      $region21: #{tpu_custom_call.1} parent=5 // pred_check
        _
      $region22: #{tpu_custom_call.1} parent=5 // pred_check_branch
        %110 = sbr.rel (%p107) target = $region24
      $region23: #{tpu_custom_call.1} parent=5 // pred_region
        %s111 = ssub.s32 %s13, 1
        %s112 = sand.u32 %s26, 1
        %s113 = scalar_lea.sflag [#allocation3], %s112
        %s114 = sand.u32 %s26, 1
        %s115 = smul.addr %s114, 512
        %s116 = scalar_lea.vmem [#allocation2], %s115
        // Predicated region
        $region25: #{tpu_custom_call.1} parent=23 // pred_check
          %p117 = pneg %p39
        $region26: #{tpu_custom_call.1} parent=23 // pred_check_branch
          %119 = sbr.rel (%p117) target = $region28
        $region27: #{tpu_custom_call.1} parent=23 // pred_region
          %120 = dma.done %s113, 8192
        $region28: #{tpu_custom_call.1} parent=23 // pred_fallthru
          _
        %s121 = sand.u32 %s26, 1
        %s122 = scalar_lea.sflag [#allocation3], %s121
        %s123 = sand.u32 %s26, 1
        %s124 = smul.addr %s123, 512
        %s125 = scalar_lea.vmem [#allocation2], %s124
        %p126 = pneg %p39
        %p127 = pneg %p36
        %p128 = pneg %p65
        %p129 = pneg %p62
        %s130 = sand.u32 %s52, 1
        %s131 = scalar_lea.sflag [#allocation4], %s130
        %s132 = sand.u32 %s52, 1
        %s133 = smul.addr %s132, 512
        %s134 = scalar_lea.vmem [#allocation5], %s133
        %s135 = smul.u32 64, %s18
        %s136 = smul.u32 64, %s18
        %v137 = vlaneseq
        %v138 = vand.u32 %v137, 127
        %v139 = vand.u32 %v138, 3
        %vm140 = vcmp.lt.s32.totalorder %v139, 2
        %v141 = vsel %vm140, 0.0, -inf
        %vm142 = vcmp.eq.s32.totalorder %v139, 2
        %vm143 = vcmp.eq.s32.totalorder %v139, 3
        %v144 = vsel %vm143, 16.0, inf
        %v145 = vsel %vm142, 16.0, %v144
        %v146 = vld [vmem:[%s116] sm:$0xff]
        %v147 = vld [vmem:[%s116 + $0x8] sm:$0xff]
        %v148 = vld [vmem:[%s116 + $0x10] sm:$0xff]
        %v149 = vld [vmem:[%s116 + $0x18] sm:$0xff]
        %v150 = vld [vmem:[%s116 + $0x20] sm:$0xff]
        %v151 = vld [vmem:[%s116 + $0x28] sm:$0xff]
        %v152 = vld [vmem:[%s116 + $0x30] sm:$0xff]
        %v153 = vld [vmem:[%s116 + $0x38] sm:$0xff]
        %v154 = vld [vmem:[%s116 + $0x40] sm:$0xff]
        %v155 = vld [vmem:[%s116 + $0x48] sm:$0xff]
        %v156 = vld [vmem:[%s116 + $0x50] sm:$0xff]
        %v157 = vld [vmem:[%s116 + $0x58] sm:$0xff]
        %v158 = vld [vmem:[%s116 + $0x60] sm:$0xff]
        %v159 = vld [vmem:[%s116 + $0x68] sm:$0xff]
        %v160 = vld [vmem:[%s116 + $0x70] sm:$0xff]
        %v161 = vld [vmem:[%s116 + $0x78] sm:$0xff]
        %v162 = vld [vmem:[%s116 + $0x80] sm:$0xff]
        %v163 = vld [vmem:[%s116 + $0x88] sm:$0xff]
        %v164 = vld [vmem:[%s116 + $0x90] sm:$0xff]
        %v165 = vld [vmem:[%s116 + $0x98] sm:$0xff]
        %v166 = vld [vmem:[%s116 + $0xa0] sm:$0xff]
        %v167 = vld [vmem:[%s116 + $0xa8] sm:$0xff]
        %v168 = vld [vmem:[%s116 + $0xb0] sm:$0xff]
        %v169 = vld [vmem:[%s116 + $0xb8] sm:$0xff]
        %v170 = vld [vmem:[%s116 + $0xc0] sm:$0xff]
        %v171 = vld [vmem:[%s116 + $0xc8] sm:$0xff]
        %v172 = vld [vmem:[%s116 + $0xd0] sm:$0xff]
        %v173 = vld [vmem:[%s116 + $0xd8] sm:$0xff]
        %v174 = vld [vmem:[%s116 + $0xe0] sm:$0xff]
        %v175 = vld [vmem:[%s116 + $0xe8] sm:$0xff]
        %v176 = vld [vmem:[%s116 + $0xf0] sm:$0xff]
        %v177 = vld [vmem:[%s116 + $0xf8] sm:$0xff]
        %v178 = vld [vmem:[%s116 + $0x100] sm:$0xff]
        %v179 = vld [vmem:[%s116 + $0x108] sm:$0xff]
        %v180 = vld [vmem:[%s116 + $0x110] sm:$0xff]
        %v181 = vld [vmem:[%s116 + $0x118] sm:$0xff]
        %v182 = vld [vmem:[%s116 + $0x120] sm:$0xff]
        %v183 = vld [vmem:[%s116 + $0x128] sm:$0xff]
        %v184 = vld [vmem:[%s116 + $0x130] sm:$0xff]
        %v185 = vld [vmem:[%s116 + $0x138] sm:$0xff]
        %v186 = vld [vmem:[%s116 + $0x140] sm:$0xff]
        %v187 = vld [vmem:[%s116 + $0x148] sm:$0xff]
        %v188 = vld [vmem:[%s116 + $0x150] sm:$0xff]
        %v189 = vld [vmem:[%s116 + $0x158] sm:$0xff]
        %v190 = vld [vmem:[%s116 + $0x160] sm:$0xff]
        %v191 = vld [vmem:[%s116 + $0x168] sm:$0xff]
        %v192 = vld [vmem:[%s116 + $0x170] sm:$0xff]
        %v193 = vld [vmem:[%s116 + $0x178] sm:$0xff]
        %v194 = vld [vmem:[%s116 + $0x180] sm:$0xff]
        %v195 = vld [vmem:[%s116 + $0x188] sm:$0xff]
        %v196 = vld [vmem:[%s116 + $0x190] sm:$0xff]
        %v197 = vld [vmem:[%s116 + $0x198] sm:$0xff]
        %v198 = vld [vmem:[%s116 + $0x1a0] sm:$0xff]
        %v199 = vld [vmem:[%s116 + $0x1a8] sm:$0xff]
        %v200 = vld [vmem:[%s116 + $0x1b0] sm:$0xff]
        %v201 = vld [vmem:[%s116 + $0x1b8] sm:$0xff]
        %v202 = vld [vmem:[%s116 + $0x1c0] sm:$0xff]
        %v203 = vld [vmem:[%s116 + $0x1c8] sm:$0xff]
        %v204 = vld [vmem:[%s116 + $0x1d0] sm:$0xff]
        %v205 = vld [vmem:[%s116 + $0x1d8] sm:$0xff]
        %v206 = vld [vmem:[%s116 + $0x1e0] sm:$0xff]
        %v207 = vld [vmem:[%s116 + $0x1e8] sm:$0xff]
        %v208 = vld [vmem:[%s116 + $0x1f0] sm:$0xff]
        %v209 = vld [vmem:[%s116 + $0x1f8] sm:$0xff]
        %v210 = vmax.f32 %v146, %v141
        %v211 = vmax.f32 %v147, %v141
        %v212 = vmax.f32 %v148, %v141
        %v213 = vmax.f32 %v149, %v141
        %v214 = vmax.f32 %v150, %v141
        %v215 = vmax.f32 %v151, %v141
        %v216 = vmax.f32 %v152, %v141
        %v217 = vmax.f32 %v153, %v141
        %v218 = vmax.f32 %v154, %v141
        %v219 = vmax.f32 %v155, %v141
        %v220 = vmax.f32 %v156, %v141
        %v221 = vmax.f32 %v157, %v141
        %v222 = vmax.f32 %v158, %v141
        %v223 = vmax.f32 %v159, %v141
        %v224 = vmax.f32 %v160, %v141
        %v225 = vmax.f32 %v161, %v141
        %v226 = vmax.f32 %v162, %v141
        %v227 = vmax.f32 %v163, %v141
        %v228 = vmax.f32 %v164, %v141
        %v229 = vmax.f32 %v165, %v141
        %v230 = vmax.f32 %v166, %v141
        %v231 = vmax.f32 %v167, %v141
        %v232 = vmax.f32 %v168, %v141
        %v233 = vmax.f32 %v169, %v141
        %v234 = vmax.f32 %v170, %v141
        %v235 = vmax.f32 %v171, %v141
        %v236 = vmax.f32 %v172, %v141
        %v237 = vmax.f32 %v173, %v141
        %v238 = vmax.f32 %v174, %v141
        %v239 = vmax.f32 %v175, %v141
        %v240 = vmax.f32 %v176, %v141
        %v241 = vmax.f32 %v177, %v141
        %v242 = vmax.f32 %v178, %v141
        %v243 = vmax.f32 %v179, %v141
        %v244 = vmax.f32 %v180, %v141
        %v245 = vmax.f32 %v181, %v141
        %v246 = vmax.f32 %v182, %v141
        %v247 = vmax.f32 %v183, %v141
        %v248 = vmax.f32 %v184, %v141
        %v249 = vmax.f32 %v185, %v141
        %v250 = vmax.f32 %v186, %v141
        %v251 = vmax.f32 %v187, %v141
        %v252 = vmax.f32 %v188, %v141
        %v253 = vmax.f32 %v189, %v141
        %v254 = vmax.f32 %v190, %v141
        %v255 = vmax.f32 %v191, %v141
        %v256 = vmax.f32 %v192, %v141
        %v257 = vmax.f32 %v193, %v141
        %v258 = vmax.f32 %v194, %v141
        %v259 = vmax.f32 %v195, %v141
        %v260 = vmax.f32 %v196, %v141
        %v261 = vmax.f32 %v197, %v141
        %v262 = vmax.f32 %v198, %v141
        %v263 = vmax.f32 %v199, %v141
        %v264 = vmax.f32 %v200, %v141
        %v265 = vmax.f32 %v201, %v141
        %v266 = vmax.f32 %v202, %v141
        %v267 = vmax.f32 %v203, %v141
        %v268 = vmax.f32 %v204, %v141
        %v269 = vmax.f32 %v205, %v141
        %v270 = vmax.f32 %v206, %v141
        %v271 = vmax.f32 %v207, %v141
        %v272 = vmax.f32 %v208, %v141
        %v273 = vmax.f32 %v209, %v141
        %v274 = vmin.f32 %v210, %v145
        %v275 = vmin.f32 %v211, %v145
        %v276 = vmin.f32 %v212, %v145
        %v277 = vmin.f32 %v213, %v145
        %v278 = vmin.f32 %v214, %v145
        %v279 = vmin.f32 %v215, %v145
        %v280 = vmin.f32 %v216, %v145
        %v281 = vmin.f32 %v217, %v145
        %v282 = vmin.f32 %v218, %v145
        %v283 = vmin.f32 %v219, %v145
        %v284 = vmin.f32 %v220, %v145
        %v285 = vmin.f32 %v221, %v145
        %v286 = vmin.f32 %v222, %v145
        %v287 = vmin.f32 %v223, %v145
        %v288 = vmin.f32 %v224, %v145
        %v289 = vmin.f32 %v225, %v145
        %v290 = vmin.f32 %v226, %v145
        %v291 = vmin.f32 %v227, %v145
        %v292 = vmin.f32 %v228, %v145
        %v293 = vmin.f32 %v229, %v145
        %v294 = vmin.f32 %v230, %v145
        %v295 = vmin.f32 %v231, %v145
        %v296 = vmin.f32 %v232, %v145
        %v297 = vmin.f32 %v233, %v145
        %v298 = vmin.f32 %v234, %v145
        %v299 = vmin.f32 %v235, %v145
        %v300 = vmin.f32 %v236, %v145
        %v301 = vmin.f32 %v237, %v145
        %v302 = vmin.f32 %v238, %v145
        %v303 = vmin.f32 %v239, %v145
        %v304 = vmin.f32 %v240, %v145
        %v305 = vmin.f32 %v241, %v145
        %v306 = vmin.f32 %v242, %v145
        %v307 = vmin.f32 %v243, %v145
        %v308 = vmin.f32 %v244, %v145
        %v309 = vmin.f32 %v245, %v145
        %v310 = vmin.f32 %v246, %v145
        %v311 = vmin.f32 %v247, %v145
        %v312 = vmin.f32 %v248, %v145
        %v313 = vmin.f32 %v249, %v145
        %v314 = vmin.f32 %v250, %v145
        %v315 = vmin.f32 %v251, %v145
        %v316 = vmin.f32 %v252, %v145
        %v317 = vmin.f32 %v253, %v145
        %v318 = vmin.f32 %v254, %v145
        %v319 = vmin.f32 %v255, %v145
        %v320 = vmin.f32 %v256, %v145
        %v321 = vmin.f32 %v257, %v145
        %v322 = vmin.f32 %v258, %v145
        %v323 = vmin.f32 %v259, %v145
        %v324 = vmin.f32 %v260, %v145
        %v325 = vmin.f32 %v261, %v145
        %v326 = vmin.f32 %v262, %v145
        %v327 = vmin.f32 %v263, %v145
        %v328 = vmin.f32 %v264, %v145
        %v329 = vmin.f32 %v265, %v145
        %v330 = vmin.f32 %v266, %v145
        %v331 = vmin.f32 %v267, %v145
        %v332 = vmin.f32 %v268, %v145
        %v333 = vmin.f32 %v269, %v145
        %v334 = vmin.f32 %v270, %v145
        %v335 = vmin.f32 %v271, %v145
        %v336 = vmin.f32 %v272, %v145
        %v337 = vmin.f32 %v273, %v145
        %338 = vst [vmem:[%s134] sm:$0xff] %v274
        %339 = vst [vmem:[%s134 + $0x8] sm:$0xff] %v275
        %340 = vst [vmem:[%s134 + $0x10] sm:$0xff] %v276
        %341 = vst [vmem:[%s134 + $0x18] sm:$0xff] %v277
        %342 = vst [vmem:[%s134 + $0x20] sm:$0xff] %v278
        %343 = vst [vmem:[%s134 + $0x28] sm:$0xff] %v279
        %344 = vst [vmem:[%s134 + $0x30] sm:$0xff] %v280
        %345 = vst [vmem:[%s134 + $0x38] sm:$0xff] %v281
        %346 = vst [vmem:[%s134 + $0x40] sm:$0xff] %v282
        %347 = vst [vmem:[%s134 + $0x48] sm:$0xff] %v283
        %348 = vst [vmem:[%s134 + $0x50] sm:$0xff] %v284
        %349 = vst [vmem:[%s134 + $0x58] sm:$0xff] %v285
        %350 = vst [vmem:[%s134 + $0x60] sm:$0xff] %v286
        %351 = vst [vmem:[%s134 + $0x68] sm:$0xff] %v287
        %352 = vst [vmem:[%s134 + $0x70] sm:$0xff] %v288
        %353 = vst [vmem:[%s134 + $0x78] sm:$0xff] %v289
        %354 = vst [vmem:[%s134 + $0x80] sm:$0xff] %v290
        %355 = vst [vmem:[%s134 + $0x88] sm:$0xff] %v291
        %356 = vst [vmem:[%s134 + $0x90] sm:$0xff] %v292
        %357 = vst [vmem:[%s134 + $0x98] sm:$0xff] %v293
        %358 = vst [vmem:[%s134 + $0xa0] sm:$0xff] %v294
        %359 = vst [vmem:[%s134 + $0xa8] sm:$0xff] %v295
        %360 = vst [vmem:[%s134 + $0xb0] sm:$0xff] %v296
        %361 = vst [vmem:[%s134 + $0xb8] sm:$0xff] %v297
        %362 = vst [vmem:[%s134 + $0xc0] sm:$0xff] %v298
        %363 = vst [vmem:[%s134 + $0xc8] sm:$0xff] %v299
        %364 = vst [vmem:[%s134 + $0xd0] sm:$0xff] %v300
        %365 = vst [vmem:[%s134 + $0xd8] sm:$0xff] %v301
        %366 = vst [vmem:[%s134 + $0xe0] sm:$0xff] %v302
        %367 = vst [vmem:[%s134 + $0xe8] sm:$0xff] %v303
        %368 = vst [vmem:[%s134 + $0xf0] sm:$0xff] %v304
        %369 = vst [vmem:[%s134 + $0xf8] sm:$0xff] %v305
        %370 = vst [vmem:[%s134 + $0x100] sm:$0xff] %v306
        %371 = vst [vmem:[%s134 + $0x108] sm:$0xff] %v307
        %372 = vst [vmem:[%s134 + $0x110] sm:$0xff] %v308
        %373 = vst [vmem:[%s134 + $0x118] sm:$0xff] %v309
        %374 = vst [vmem:[%s134 + $0x120] sm:$0xff] %v310
        %375 = vst [vmem:[%s134 + $0x128] sm:$0xff] %v311
        %376 = vst [vmem:[%s134 + $0x130] sm:$0xff] %v312
        %377 = vst [vmem:[%s134 + $0x138] sm:$0xff] %v313
        %378 = vst [vmem:[%s134 + $0x140] sm:$0xff] %v314
        %379 = vst [vmem:[%s134 + $0x148] sm:$0xff] %v315
        %380 = vst [vmem:[%s134 + $0x150] sm:$0xff] %v316
        %381 = vst [vmem:[%s134 + $0x158] sm:$0xff] %v317
        %382 = vst [vmem:[%s134 + $0x160] sm:$0xff] %v318
        %383 = vst [vmem:[%s134 + $0x168] sm:$0xff] %v319
        %384 = vst [vmem:[%s134 + $0x170] sm:$0xff] %v320
        %385 = vst [vmem:[%s134 + $0x178] sm:$0xff] %v321
        %386 = vst [vmem:[%s134 + $0x180] sm:$0xff] %v322
        %387 = vst [vmem:[%s134 + $0x188] sm:$0xff] %v323
        %388 = vst [vmem:[%s134 + $0x190] sm:$0xff] %v324
        %389 = vst [vmem:[%s134 + $0x198] sm:$0xff] %v325
        %390 = vst [vmem:[%s134 + $0x1a0] sm:$0xff] %v326
        %391 = vst [vmem:[%s134 + $0x1a8] sm:$0xff] %v327
        %392 = vst [vmem:[%s134 + $0x1b0] sm:$0xff] %v328
        %393 = vst [vmem:[%s134 + $0x1b8] sm:$0xff] %v329
        %394 = vst [vmem:[%s134 + $0x1c0] sm:$0xff] %v330
        %395 = vst [vmem:[%s134 + $0x1c8] sm:$0xff] %v331
        %396 = vst [vmem:[%s134 + $0x1d0] sm:$0xff] %v332
        %397 = vst [vmem:[%s134 + $0x1d8] sm:$0xff] %v333
        %398 = vst [vmem:[%s134 + $0x1e0] sm:$0xff] %v334
        %399 = vst [vmem:[%s134 + $0x1e8] sm:$0xff] %v335
        %400 = vst [vmem:[%s134 + $0x1f0] sm:$0xff] %v336
        %401 = vst [vmem:[%s134 + $0x1f8] sm:$0xff] %v337
        %s402 = sand.u32 %s52, 1
        %s403 = scalar_lea.sflag [#allocation4], %s402
        %s404 = sand.u32 %s52, 1
        %s405 = smul.addr %s404, 512
        %s406 = scalar_lea.vmem [#allocation5], %s405
        // Predicated region
        $region29: #{tpu_custom_call.1} parent=23 // pred_check
          %p407 = pneg %p62
        $region30: #{tpu_custom_call.1} parent=23 // pred_check_branch
          %409 = sbr.rel (%p407) target = $region32
        $region31: #{tpu_custom_call.1} parent=23 // pred_region
          %s410 = smul.u32 64, %s18
          %s412 = ssub.s32 8192, 8192
          %413 = vsyncadd %s403, %s412
          %s414 = smul.addr %s410, 128
          %s415 = scalar_lea.hbm %s1, %s414
          %s416 = sshll.u32 %s406, 4
          %s417 = int_to_ptr.vmem [resolvable:$true] %s416
          %422 = dma.vmem_to_hbm [thread:$0]  %s417, 8192, %s415, %s403, 128, 128, 8
        $region32: #{tpu_custom_call.1} parent=23 // pred_fallthru
          _
      $region24: #{tpu_custom_call.1} parent=5 // pred_fallthru
        _
      %p423 = scmp.le.s32.totalorder 2, %s13
      // Predicated region
      $region33: #{tpu_custom_call.1} parent=5 // pred_check
        %p424 = pneg %p423
      $region34: #{tpu_custom_call.1} parent=5 // pred_check_branch
        %426 = sbr.rel (%p424) target = $region36
      $region35: #{tpu_custom_call.1} parent=5 // pred_region
        %s427 = ssub.s32 %s13, 2
        // Predicated region
        $region37: #{tpu_custom_call.1} parent=35 // pred_check
          %p428 = pneg %p68
        $region38: #{tpu_custom_call.1} parent=35 // pred_check_branch
          %430 = sbr.rel (%p428) target = $region40
        $region39: #{tpu_custom_call.1} parent=35 // pred_region
          %s431 = sand.u32 %s53, 1
          %s432 = scalar_lea.sflag [#allocation4], %s431
          %s433 = sand.u32 %s53, 1
          %s434 = smul.addr %s433, 512
          %s435 = scalar_lea.vmem [#allocation5], %s434
          %436 = dma.done %s432, 8192
        $region40: #{tpu_custom_call.1} parent=35 // pred_fallthru
          _
      $region36: #{tpu_custom_call.1} parent=5 // pred_fallthru
        _
    $region6: #{tpu_custom_call.1} parent=1 // loop_footer
      %s17 = sadd.s32 1, %s13
    $region7: #{tpu_custom_call.1} parent=1 // loop_footer_branch
      %12 = sbr.rel target = $region3
    $region8: #{tpu_custom_call.1} parent=1 // loop_exit
      _
    %437 = vsyncpa [#allocation3], 1
    %s438 = scalar_lea.sflag [#allocation3], 1
    %439 = vsyncpa %s438, 1
    %440 = vsyncpa [#allocation4], 1
    %s441 = scalar_lea.sflag [#allocation4], 1
    %442 = vsyncpa %s441, 1

</llo_original>
